<compile_context>
chip_gen: v7x
topology: tpu7x:2x2x1
jax: 0.10.0
libtpu: 0.0.40
codegen_flags: <defaults>
</compile_context>

<pallas_src>
import functools

import jax
import jax.numpy as jnp
from jax import lax
from jax.experimental import pallas as pl
from jax.experimental.pallas import tpu as pltpu


# --------------------------------------------------------------------------------------
# Pass 1: conv (block-Toeplitz matmul, bf16 operands / f32 accumulate) + per-block,
# per-lane BN partial statistics.  Grid = (N // B,), "parallel".
# --------------------------------------------------------------------------------------
def conv_stats_kernel(x_ref, w_ref, y_ref, stats_ref, *, B, Ho, KH, WpCin, WoCout):
    # x_ref:     (B, Hp, Wp*Cin)        bf16  pre-padded, lane-packed input block
    # w_ref:     (KH, Wp*Cin, Wo*Cout)  bf16  block-Toeplitz conv weight (grid-resident)
    # y_ref:     (B, Ho, Wo*Cout)       bf16  lane-dense conv output block
    # stats_ref: (1, 2, Wo*Cout)        f32   packed [per-lane mean; per-lane M2] for block
    acc = jnp.zeros((B * Ho, WoCout), jnp.float32)
    for kh in range(KH):  # static, unrolled: KH matmuls with K = Wp*Cin, N = Wo*Cout lanes
        a = x_ref[:, kh:kh + Ho, :].reshape(B * Ho, WpCin)          # sublane-offset slice
        acc = acc + jnp.dot(a, w_ref[kh], preferred_element_type=jnp.float32)

    # Per-(block, wo*Cout-lane) statistics over the B*Ho rows: mean + sum of squared
    # deviations.  Combined across equal-count groups in the wrapper (stable variance).
    m = acc.mean(axis=0, keepdims=True)                             # (1, Wo*Cout)
    d = acc - m
    stats_ref[0, 0:1, :] = m
    stats_ref[0, 1:2, :] = (d * d).sum(axis=0, keepdims=True)

    # Lane-dense (Ho, Wo*Cout) store straight from the accumulator; bf16 halves writeback.
    y_ref[...] = acc.reshape(B, Ho, WoCout).astype(y_ref.dtype)


# --------------------------------------------------------------------------------------
# Pass 2: batch-norm affine + LeakyReLU on lane-dense (B, Ho, Wo*Cout) tiles.
# scale/shift arrive already tiled to the lane layout (lane = wo*Cout + co).
# --------------------------------------------------------------------------------------
def bn_lrelu_kernel(y_ref, scale_ref, shift_ref, o_ref, *, neg_slope):
    y = y_ref[...].astype(jnp.float32) * scale_ref[...] + shift_ref[...]
    o_ref[...] = jnp.where(y > 0, y, neg_slope * y)


# --------------------------------------------------------------------------------------
# Wrapper: NCHW in / NCHW out (PyTorch convention).
# --------------------------------------------------------------------------------------
def cnn_block(x_nchw, weight_oihw, gamma, beta, *, stride=1, padding=1,
              eps=1e-5, neg_slope=0.1, batch_block=None):
    N, Cin, H, W = x_nchw.shape
    Cout, Cin_w, KH, KW = weight_oihw.shape
    assert Cin == Cin_w, "input/weight channel mismatch"
    assert stride == 1, "this Pallas kernel implements stride=1 Conv2d"
    Ho = H + 2 * padding - KH + 1
    Wo = W + 2 * padding - KW + 1
    assert Ho >= 1 and Wo >= 1, "invalid conv geometry"
    Hp, Wp = H + 2 * padding, W + 2 * padding
    WpCin = Wp * Cin
    WoCout = Wo * Cout

    # Batch elements per grid step: amortize per-step overhead (largest divisor of N whose
    # x+y block footprint stays small).  At demo sizes this is the whole batch (grid=(1,)).
    # On v7x with bigger N, num_blocks >= 2 re-enables megacore sharding of the batch axis.
    if batch_block is None:
        budget = 2 * 1024 * 1024
        batch_block = 1
        for cand in range(N, 0, -1):
            if N % cand == 0 and cand * (Hp * WpCin + Ho * WoCout) * 2 <= budget:
                batch_block = cand
                break
    assert N % batch_block == 0
    num_blocks = N // batch_block

    # Input prep (one fused XLA pass): NCHW -> NHWC, halo pad, lane-pack (W,Cin)->lanes, bf16.
    x = jnp.transpose(x_nchw, (0, 2, 3, 1))
    x = jnp.pad(x, ((0, 0), (padding, padding), (padding, padding), (0, 0)))
    x = x.reshape(N, Hp, WpCin).astype(jnp.bfloat16)

    # Block-Toeplitz weight: Wmat[kh, w*Cin+ci, wo*Cout+co] = W[co,ci,kh,w-wo] (0 outside tap).
    w_t = jnp.transpose(weight_oihw, (2, 3, 1, 0)).astype(jnp.float32)   # (KH, KW, Cin, Cout)
    kw_idx = jnp.arange(Wp)[:, None] - jnp.arange(Wo)[None, :]           # (Wp, Wo)
    valid = ((kw_idx >= 0) & (kw_idx < KW)).astype(jnp.float32)
    kw_c = jnp.clip(kw_idx, 0, KW - 1)
    wm = w_t[:, kw_c, :, :] * valid[None, :, :, None, None]              # (KH,Wp,Wo,Cin,Cout)
    wmat = (jnp.transpose(wm, (0, 1, 3, 2, 4))
            .reshape(KH, WpCin, WoCout).astype(jnp.bfloat16))

    # Per-generation VMEM budget: ~48 MiB on v7x (64 MiB physical), up to 96 MiB on v5e/v6e.
    try:
        vmem_cap = int(pltpu.get_tpu_info().vmem_capacity_bytes)
    except Exception:
        vmem_cap = 64 * 1024 * 1024
    vmem_limit = min(vmem_cap * 3 // 4, 96 * 1024 * 1024)
    cparams = pltpu.CompilerParams(
        dimension_semantics=("parallel",),   # only v7x (2 TCs) shards this; harmless elsewhere
        vmem_limit_bytes=vmem_limit,
    )

    # ---------------- pass 1: conv + packed per-block partial stats ----------------------
    k1 = functools.partial(conv_stats_kernel, B=batch_block, Ho=Ho, KH=KH,
                           WpCin=WpCin, WoCout=WoCout)
    y, stats = pl.pallas_call(
        k1,
        out_shape=(jax.ShapeDtypeStruct((N, Ho, WoCout), jnp.bfloat16),
                   jax.ShapeDtypeStruct((num_blocks, 2, WoCout), jnp.float32)),
        grid_spec=pltpu.PrefetchScalarGridSpec(
            num_scalar_prefetch=0,
            grid=(num_blocks,),
            in_specs=[
                pl.BlockSpec((batch_block, Hp, WpCin), lambda n: (n, 0, 0)),
                pl.BlockSpec((KH, WpCin, WoCout), lambda n: (0, 0, 0)),
            ],
            out_specs=(
                pl.BlockSpec((batch_block, Ho, WoCout), lambda n: (n, 0, 0)),
                pl.BlockSpec((1, 2, WoCout), lambda n: (n, 0, 0)),
            ),
        ),
        compiler_params=cparams,
    )(x, wmat)

    # Tiny cross-group stat combine (O(num_blocks*Wo*Cout) XLA glue).  All groups contribute
    # exactly batch_block*Ho samples, so the equal-count Chan merge below is exact; ragged
    # extents would need count-weighted merging.
    cnt = jnp.float32(batch_block * Ho)
    mu_g = stats[:, 0, :].reshape(num_blocks * Wo, Cout)       # lane = wo*Cout + co
    m2_g = stats[:, 1, :].reshape(num_blocks * Wo, Cout)
    mean = jnp.mean(mu_g, axis=0)                              # (Cout,)
    m2 = jnp.sum(m2_g, axis=0) + cnt * jnp.sum((mu_g - mean) ** 2, axis=0)
    var = m2 / jnp.float32(N * Ho * Wo)                        # biased variance (torch BN)
    scale = gamma.astype(jnp.float32) * lax.rsqrt(var + eps)
    shift = beta.astype(jnp.float32) - mean * scale
    scale_row = jnp.tile(scale, Wo).reshape(1, WoCout)         # lane index = wo*Cout + co
    shift_row = jnp.tile(shift, Wo).reshape(1, WoCout)

    # ---------------- pass 2: normalize + LeakyReLU (lane-dense) -------------------------
    k2 = functools.partial(bn_lrelu_kernel, neg_slope=neg_slope)
    out_rows = pl.pallas_call(
        k2,
        out_shape=jax.ShapeDtypeStruct((N, Ho, WoCout), jnp.float32),
        grid_spec=pltpu.PrefetchScalarGridSpec(
            num_scalar_prefetch=0,
            grid=(num_blocks,),
            in_specs=[
                pl.BlockSpec((batch_block, Ho, WoCout), lambda n: (n, 0, 0)),
                pl.BlockSpec((1, WoCout), lambda n: (0, 0)),
                pl.BlockSpec((1, WoCout), lambda n: (0, 0)),
            ],
            out_specs=pl.BlockSpec((batch_block, Ho, WoCout), lambda n: (n, 0, 0)),
        ),
        compiler_params=cparams,
    )(y, scale_row, shift_row)

    out = out_rows.reshape(N, Ho, Wo, Cout)
    return jnp.transpose(out, (0, 3, 1, 2))     # NHWC -> NCHW (PyTorch output convention)


# --------------------------------------------------------------------------------------
# Pure-JAX reference mirroring the PyTorch forward (training-mode BatchNorm, f32).
# --------------------------------------------------------------------------------------
def cnn_block_reference(x_nchw, weight_oihw, gamma, beta, *,
                        padding=1, eps=1e-5, neg_slope=0.1):
    y = lax.conv_general_dilated(
        x_nchw.astype(jnp.float32), weight_oihw.astype(jnp.float32),
        window_strides=(1, 1), padding=[(padding, padding), (padding, padding)],
        dimension_numbers=("NCHW", "OIHW", "NCHW"))
    mean = y.mean(axis=(0, 2, 3), keepdims=True)
    var = y.var(axis=(0, 2, 3), keepdims=True)        # biased, as torch uses to normalize
    yn = (y - mean) * lax.rsqrt(var + eps)
    yn = yn * gamma.reshape(1, -1, 1, 1) + beta.reshape(1, -1, 1, 1)
    return jnp.where(yn > 0, yn, neg_slope * yn)


if __name__ == "__main__":
    key = jax.random.PRNGKey(0)
    k_x, k_w, k_g, k_b = jax.random.split(key, 4)

    N, Cin, Cout, H, W, Kk = 2, 4, 8, 16, 16, 3

    x = jax.random.normal(k_x, (N, Cin, H, W), dtype=jnp.float32)
    # Deterministic synthetic parameters (shapes from nn.Conv2d / nn.BatchNorm2d).
    weight = jax.random.normal(k_w, (Cout, Cin, Kk, Kk), dtype=jnp.float32)
    weight = weight / jnp.sqrt(jnp.float32(Cin * Kk * Kk))
    gamma = 1.0 + 0.1 * jax.random.normal(k_g, (Cout,), dtype=jnp.float32)
    beta = 0.1 * jax.random.normal(k_b, (Cout,), dtype=jnp.float32)

    out = cnn_block(x, weight, gamma, beta)
    out = jax.block_until_ready(out)

    ref = cnn_block_reference(x, weight, gamma, beta)
    assert out.shape == ref.shape == (N, Cout, H, W)
    # Loose tolerance: bf16 MXU operands + bf16 y intermediate (f32 accumulation/normalize).
    assert jnp.allclose(out, ref, atol=3e-2, rtol=3e-2), float(jnp.abs(out - ref).max())

    print("KERNEL_OK")
</pallas_src>

<mosaic_0001>
module attributes {stable_mosaic.version = 11 : i64} {
  func.func @conv_stats_kernel(%arg0: i32, %arg1: memref<2x18x72xbf16, #tpu.memory_space<vmem>>, %arg2: memref<3x72x128xbf16, #tpu.memory_space<vmem>>, %arg3: memref<2x16x128xbf16, #tpu.memory_space<vmem>>, %arg4: memref<1x2x128xf32, #tpu.memory_space<vmem>>) attributes {dimension_semantics = [#tpu.dimension_semantics<parallel>], iteration_bounds = array<i64: 1>, scalar_prefetch = 0 : i64, scratch_operands = 0 : i64, tpu.core_type = #tpu.core_type<tc>, window_params = [{transform_indices = @transform_0, window_bounds = array<i64: 2, 18, 72>}, {pipeline_mode = #tpu.pipeline_mode<synchronous>, transform_indices = @transform_1, window_bounds = array<i64: 3, 72, 128>}, {transform_indices = @transform_2, window_bounds = array<i64: 2, 16, 128>}, {transform_indices = @transform_3, window_bounds = array<i64: 1, 2, 128>}]} {
    %cst = arith.constant 0.000000e+00 : f32
    %0 = vector.broadcast %cst : f32 to vector<32x128xf32>
    %c0 = arith.constant 0 : index
    %c0_0 = arith.constant 0 : index
    %c0_1 = arith.constant 0 : index
    %1 = vector.load %arg1[%c0, %c0_0, %c0_1] : memref<2x18x72xbf16, #tpu.memory_space<vmem>>, vector<2x16x72xbf16>
    %2 = vector.shape_cast %1 : vector<2x16x72xbf16> to vector<32x72xbf16>
    %c0_2 = arith.constant 0 : index
    %c0_3 = arith.constant 0 : index
    %c0_4 = arith.constant 0 : index
    %3 = vector.load %arg2[%c0_2, %c0_3, %c0_4] : memref<3x72x128xbf16, #tpu.memory_space<vmem>>, vector<1x72x128xbf16>
    %4 = vector.shape_cast %3 : vector<1x72x128xbf16> to vector<72x128xbf16>
    %cst_5 = arith.constant dense<0.000000e+00> : vector<32x128xf32>
    %5 = tpu.matmul %2, %4, %cst_5 {dimension_numbers = #tpu.dot_dimension_numbers<[1], [0], [0], [1], [0, 0, 1, 1], [], []>} : vector<32x72xbf16>, vector<72x128xbf16>, vector<32x128xf32> -> vector<32x128xf32>
    %6 = arith.addf %0, %5 : vector<32x128xf32>
    %c0_6 = arith.constant 0 : index
    %c1 = arith.constant 1 : index
    %c0_7 = arith.constant 0 : index
    %7 = vector.load %arg1[%c0_6, %c1, %c0_7] : memref<2x18x72xbf16, #tpu.memory_space<vmem>>, vector<2x16x72xbf16>
    %8 = vector.shape_cast %7 : vector<2x16x72xbf16> to vector<32x72xbf16>
    %c1_8 = arith.constant 1 : index
    %c0_9 = arith.constant 0 : index
    %c0_10 = arith.constant 0 : index
    %9 = vector.load %arg2[%c1_8, %c0_9, %c0_10] : memref<3x72x128xbf16, #tpu.memory_space<vmem>>, vector<1x72x128xbf16>
    %10 = vector.shape_cast %9 : vector<1x72x128xbf16> to vector<72x128xbf16>
    %cst_11 = arith.constant dense<0.000000e+00> : vector<32x128xf32>
    %11 = tpu.matmul %8, %10, %cst_11 {dimension_numbers = #tpu.dot_dimension_numbers<[1], [0], [0], [1], [0, 0, 1, 1], [], []>} : vector<32x72xbf16>, vector<72x128xbf16>, vector<32x128xf32> -> vector<32x128xf32>
    %12 = arith.addf %6, %11 : vector<32x128xf32>
    %c0_12 = arith.constant 0 : index
    %c2 = arith.constant 2 : index
    %c0_13 = arith.constant 0 : index
    %13 = vector.load %arg1[%c0_12, %c2, %c0_13] : memref<2x18x72xbf16, #tpu.memory_space<vmem>>, vector<2x16x72xbf16>
    %14 = vector.shape_cast %13 : vector<2x16x72xbf16> to vector<32x72xbf16>
    %c2_14 = arith.constant 2 : index
    %c0_15 = arith.constant 0 : index
    %c0_16 = arith.constant 0 : index
    %15 = vector.load %arg2[%c2_14, %c0_15, %c0_16] : memref<3x72x128xbf16, #tpu.memory_space<vmem>>, vector<1x72x128xbf16>
    %16 = vector.shape_cast %15 : vector<1x72x128xbf16> to vector<72x128xbf16>
    %cst_17 = arith.constant dense<0.000000e+00> : vector<32x128xf32>
    %17 = tpu.matmul %14, %16, %cst_17 {dimension_numbers = #tpu.dot_dimension_numbers<[1], [0], [0], [1], [0, 0, 1, 1], [], []>} : vector<32x72xbf16>, vector<72x128xbf16>, vector<32x128xf32> -> vector<32x128xf32>
    %18 = arith.addf %12, %17 : vector<32x128xf32>
    %cst_18 = arith.constant dense<0.000000e+00> : vector<128xf32>
    %19 = vector.multi_reduction <add>, %18, %cst_18 [0] : vector<32x128xf32> to vector<128xf32>
    %20 = vector.shape_cast %19 : vector<128xf32> to vector<1x128xf32>
    %cst_19 = arith.constant 3.200000e+01 : f32
    %21 = vector.broadcast %cst_19 : f32 to vector<1x128xf32>
    %22 = arith.divf %20, %21 : vector<1x128xf32>
    %23 = vector.broadcast %22 : vector<1x128xf32> to vector<32x128xf32>
    %24 = arith.subf %18, %23 : vector<32x128xf32>
    %c0_20 = arith.constant 0 : index
    %c0_21 = arith.constant 0 : index
    %c0_22 = arith.constant 0 : index
    %25 = vector.load %arg4[%c0_20, %c0_21, %c0_22] : memref<1x2x128xf32, #tpu.memory_space<vmem>>, vector<1x1x128xf32>
    %26 = vector.shape_cast %25 : vector<1x1x128xf32> to vector<1x128xf32>
    %27 = vector.shape_cast %22 : vector<1x128xf32> to vector<1x1x128xf32>
    tpu.vector_store %arg4[%c0_20, %c0_21, %c0_22], %27 {strides = array<i32>} : memref<1x2x128xf32, #tpu.memory_space<vmem>>, vector<1x1x128xf32>,
    %28 = arith.mulf %24, %24 : vector<32x128xf32>
    %cst_23 = arith.constant dense<0.000000e+00> : vector<128xf32>
    %29 = vector.multi_reduction <add>, %28, %cst_23 [0] : vector<32x128xf32> to vector<128xf32>
    %30 = vector.shape_cast %29 : vector<128xf32> to vector<1x128xf32>
    %c0_24 = arith.constant 0 : index
    %c1_25 = arith.constant 1 : index
    %c0_26 = arith.constant 0 : index
    %31 = vector.load %arg4[%c0_24, %c1_25, %c0_26] : memref<1x2x128xf32, #tpu.memory_space<vmem>>, vector<1x1x128xf32>
    %32 = vector.shape_cast %31 : vector<1x1x128xf32> to vector<1x128xf32>
    %33 = vector.shape_cast %30 : vector<1x128xf32> to vector<1x1x128xf32>
    tpu.vector_store %arg4[%c0_24, %c1_25, %c0_26], %33 {strides = array<i32>} : memref<1x2x128xf32, #tpu.memory_space<vmem>>, vector<1x1x128xf32>,
    %34 = vector.shape_cast %18 : vector<32x128xf32> to vector<2x16x128xf32>
    %35 = arith.truncf %34 : vector<2x16x128xf32> to vector<2x16x128xbf16>
    %c0_27 = arith.constant 0 : index
    %c0_28 = arith.constant 0 : index
    %c0_29 = arith.constant 0 : index
    %36 = vector.load %arg3[%c0_27, %c0_28, %c0_29] : memref<2x16x128xbf16, #tpu.memory_space<vmem>>, vector<2x16x128xbf16>
    tpu.vector_store %arg3[%c0_27, %c0_28, %c0_29], %35 {strides = array<i32>} : memref<2x16x128xbf16, #tpu.memory_space<vmem>>, vector<2x16x128xbf16>,
    return
  }
  func.func @transform_0(%arg0: i32) -> (i32, i32, i32) {
    %c0_i32 = arith.constant 0 : i32
    %c0_i32_0 = arith.constant 0 : i32
    %c0_i32_1 = arith.constant 0 : i32
    return %arg0, %c0_i32, %c0_i32_0 : i32, i32, i32
  }
  func.func @transform_1(%arg0: i32) -> (i32, i32, i32) {
    %c0_i32 = arith.constant 0 : i32
    %c0_i32_0 = arith.constant 0 : i32
    %c0_i32_1 = arith.constant 0 : i32
    %c0_i32_2 = arith.constant 0 : i32
    return %c0_i32, %c0_i32_0, %c0_i32_1 : i32, i32, i32
  }
  func.func @transform_2(%arg0: i32) -> (i32, i32, i32) {
    %c0_i32 = arith.constant 0 : i32
    %c0_i32_0 = arith.constant 0 : i32
    %c0_i32_1 = arith.constant 0 : i32
    return %arg0, %c0_i32, %c0_i32_0 : i32, i32, i32
  }
  func.func @transform_3(%arg0: i32) -> (i32, i32, i32) {
    %c0_i32 = arith.constant 0 : i32
    %c0_i32_0 = arith.constant 0 : i32
    %c0_i32_1 = arith.constant 0 : i32
    return %arg0, %c0_i32, %c0_i32_0 : i32, i32, i32
  }
}

</mosaic_0001>

<llo_original>
// kernel: tpu_custom_call.1
$region0: #{tpu_custom_call.1}
  #allocation0 [shape = 'u32[]', space=smem, size = 0x4, offset = 0x4, fixed_abs, tag = 'smem constant byte address 0x4 - core index']
  #allocation1 [shape = 'u32[144,128]{1,0:T(1,128)}', space=vmem, size = 0x12000, scoped, tag = 'internal scratch']
  %s0 = inlined_call_operand.vmem [shape: bf16[2,18,72], index: 0, kind: input, shape index: {}]
  %s1 = inlined_call_operand.hbm [shape: bf16[3,72,128], index: 1, kind: input, shape index: {}]
  %s2 = inlined_call_operand.hbm [shape: bf16[2,16,128], index: 2, kind: output, shape index: {0}]
  %s3 = inlined_call_operand.hbm [shape: f32[1,2,128], index: 3, kind: output, shape index: {1}]
  %4 = xla_tuple %s2, %s3
  %s5 = sld [smem:[#allocation0]]
  $region30: #{tpu_custom_call.1} parent=0
    _
  %s7 = ssub.s32 1, %s5
  %s8 = scalar_select 0, %s7, %s5
  $region1: #{tpu_custom_call.1} parent=0
    #allocation2 [shape = 'u8[55296]{0}', space=vmem, size = 0xd800, scoped, tag = 'input window, operand 1, single buffered']
    #allocation3 [shape = 's32[1]{0}', space=sflag, size = 0x4, scoped, tag = 'scoped memory for tpu_custom_call.1']
    #allocation4 [shape = 's32[1]{0}', space=sflag, size = 0x4, scoped, tag = 'scoped memory for tpu_custom_call.1']
    #allocation5 [shape = 'u8[8192]{0}', space=vmem, size = 0x2000, scoped, tag = 'output window, operand 0, single buffered']
    #allocation6 [shape = 'u8[1024]{0}', space=vmem, size = 0x400, scoped, tag = 'output window, operand 1, single buffered']
    #allocation7 [shape = 's32[1]{0}', space=sflag, size = 0x4, scoped, tag = 'scoped memory for tpu_custom_call.1']
    %9 = vsyncpa [#allocation3], 0
    %10 = vsyncpa [#allocation4], 0
    %11 = vsyncpa [#allocation7], 0
    // Predicated region
    $region2: #{tpu_custom_call.1} parent=1 // pred_check
      _
    $region3: #{tpu_custom_call.1} parent=1 // pred_check_branch
      %13 = sbr.rel (0) target = $region5
    $region4: #{tpu_custom_call.1} parent=1 // pred_region
      _
    $region5: #{tpu_custom_call.1} parent=1 // pred_fallthru
      _
    // Predicated region
    $region6: #{tpu_custom_call.1} parent=1 // pred_check
      _
    $region7: #{tpu_custom_call.1} parent=1 // pred_check_branch
      %15 = sbr.rel (0) target = $region9
    $region8: #{tpu_custom_call.1} parent=1 // pred_region
      %s17 = ssub.s32 1728, 1728
      %18 = vsyncadd [#allocation3], %s17
      %s19 = sshll.u32 [#allocation2], 4
      %s20 = int_to_ptr.vmem [resolvable:$true] %s19
      %25 = dma.hbm_to_vmem [thread:$0]  %s1, 1728, %s20, [#allocation3], 64, 64, 4
    $region9: #{tpu_custom_call.1} parent=1 // pred_fallthru
      _
    // Predicated region
    $region10: #{tpu_custom_call.1} parent=1 // pred_check
      _
    $region11: #{tpu_custom_call.1} parent=1 // pred_check_branch
      %27 = sbr.rel (0) target = $region13
    $region12: #{tpu_custom_call.1} parent=1 // pred_region
      %28 = dma.done [#allocation3], 1728
    $region13: #{tpu_custom_call.1} parent=1 // pred_fallthru
      _
    %v30 = vld [vmem:[%s0] sm:$0xf]
    %v31 = vld [vmem:[%s0 + $0x4] sm:$0xf]
    %v32 = vld [vmem:[%s0 + $0xc] sm:$0xf]
    %v33 = vld [vmem:[%s0 + $0x10] sm:$0xf]
    %v34 = vld [vmem:[#allocation2] sm:$0xf]
    %v35 = vld [vmem:[#allocation2 + $0x4] sm:$0xf]
    %v36 = vld [vmem:[#allocation2 + $0x8] sm:$0xf]
    %v37 = vld [vmem:[#allocation2 + $0xc] sm:$0xf]
    %v38 = vld [vmem:[#allocation2 + $0x10] sm:$0xf]
    %v39 = vld [vmem:[#allocation2 + $0x14] sm:$0xf]
    %v40 = vld [vmem:[#allocation2 + $0x18] sm:$0xf]
    %v41 = vld [vmem:[#allocation2 + $0x1c] sm:$0xf]
    %v42 = vld [vmem:[#allocation2 + $0x20] sm:$0xf]
    %v43 = vld [vmem:[%s0 + $0x8] sm:$0x1]
    %v44 = vld [vmem:[%s0 + $0x14] sm:$0x1]
    %vm45 = vsmask.f32 3328
    %vm46 = vsmask.f32 7440
    %vm47 = vmor %vm45, %vm46
    %v49 = vshrl.u32 %v30, 16
    %v51 = vrot.slane %v49, 4
    %v52 = vshll.u32 %v30, 16
    %v54 = vrot.slane %v52, 5
    %v55 = vor.u32 %v51, %v54
    %v56 = vrot.slane %v55, 4
    %v58 = vshll.u32 %v31, 16
    %v60 = vrot.slane %v58, 5
    %v61 = vsel %vm47, %v56, %v60
    %v62 = vshrl.u32 %v31, 16
    %v64 = vrot.slane %v62, 4
    %v65 = vor.u32 %v64, %v60
    %v66 = vrot.slane %v65, 4
    %v68 = vshll.u32 %v43, 16
    %v70 = vrot.slane %v68, 5
    %v71 = vsel %vm47, %v66, %v70
    %v73 = vshrl.u32 %v32, 16
    %v75 = vrot.slane %v73, 4
    %v76 = vshll.u32 %v32, 16
    %v78 = vrot.slane %v76, 5
    %v79 = vor.u32 %v75, %v78
    %v80 = vrot.slane %v79, 4
    %v82 = vshll.u32 %v33, 16
    %v84 = vrot.slane %v82, 5
    %v85 = vsel %vm47, %v80, %v84
    %v86 = vshrl.u32 %v33, 16
    %v88 = vrot.slane %v86, 4
    %v89 = vor.u32 %v88, %v84
    %v90 = vrot.slane %v89, 4
    %v92 = vshll.u32 %v44, 16
    %v94 = vrot.slane %v92, 5
    %v95 = vsel %vm47, %v90, %v94
    %s96 = scalar_lea.vmem [#allocation2], 36
    %v97 = vld [vmem:[%s96] sm:$0xf]
    %v98 = vld [vmem:[%s96 + $0x4] sm:$0xf]
    %v99 = vld [vmem:[%s96 + $0x8] sm:$0xf]
    %v100 = vld [vmem:[%s96 + $0xc] sm:$0xf]
    %v101 = vld [vmem:[%s96 + $0x10] sm:$0xf]
    %v102 = vld [vmem:[%s96 + $0x14] sm:$0xf]
    %v103 = vld [vmem:[%s96 + $0x18] sm:$0xf]
    %v104 = vld [vmem:[%s96 + $0x1c] sm:$0xf]
    %v105 = vld [vmem:[%s96 + $0x20] sm:$0xf]
    %v106 = vunpack.c.l.b16 %v61
    %v107 = vunpack.c.l.b16 %v71
    %v108 = vunpack.c.l.b16 %v85
    %v109 = vunpack.c.l.b16 %v95
    %v110 = vpack.c.b16 %v107, %v106
    %v111 = vpack.c.b16 %v109, %v108
    %v121 = vunpack.c.l.b16 %v97
    %v122 = vunpack.c.l.b16 %v98
    %v123 = vunpack.c.l.b16 %v99
    %v124 = vunpack.c.l.b16 %v100
    %v125 = vunpack.c.l.b16 %v101
    %v126 = vunpack.c.l.b16 %v102
    %v127 = vunpack.c.l.b16 %v103
    %v128 = vunpack.c.l.b16 %v104
    %v129 = vunpack.c.l.b16 %v105
    %v130 = vpack.c.b16 %v122, %v121
    %v131 = vpack.c.b16 %v124, %v123
    %v132 = vpack.c.b16 %v126, %v125
    %v133 = vpack.c.b16 %v128, %v127
    %v134 = vpack.c.b16 %v129, %v129
    %vm139 = vcmask 588800
    %v141 = vsel %vm139, %v110, 0
    %v144 = vsel %vm139, %v111, 0
    %vm146 = vcmask 1043456
    %v148 = vsel %vm146, %v134, 0
    %150 = vmatprep.subr.bf16.mxu0 0
    %151 = vmatpush1.bf16.msra.mxu0 %v130
    %152 = vmatprep.subr.bf16.mxu0 0
    %153 = vmatpush1.bf16.msra.mxu0 %v131
    %154 = vmatprep.subr.bf16.mxu0 0
    %155 = vmatpush1.bf16.msra.mxu0 %v132
    %156 = vmatprep.subr.bf16.mxu0 0
    %157 = vmatpush1.bf16.msra.mxu0 %v133
    %158 = vmatprep.subr.bf16.mxu0 0
    %159 = vmatpush1.bf16.msra.mxu0 %v148
    %160 = vmatprep.subr.bf16.mxu0 0
    %161 = vmatpush1.bf16.msra.mxu0 0
    %162 = vmatprep.subr.bf16.mxu0 0
    %163 = vmatpush1.bf16.msra.mxu0 0
    %164 = vmatprep.subr.bf16.mxu0 0
    %165 = vmatpush1.bf16.msra.mxu0 0
    %166 = vmatprep.subr.bf16.mxu0 0
    %167 = vmatpush1.bf16.msra.mxu0 0
    %168 = vmatprep.subr.bf16.mxu0 0
    %169 = vmatpush1.bf16.msra.mxu0 0
    %170 = vmatprep.subr.bf16.mxu0 0
    %171 = vmatpush1.bf16.msra.mxu0 0
    %172 = vmatprep.subr.bf16.mxu0 0
    %173 = vmatpush1.bf16.msra.mxu0 0
    %174 = vmatprep.subr.bf16.mxu0 0
    %175 = vmatpush1.bf16.msra.mxu0 0
    %176 = vmatprep.subr.bf16.mxu0 0
    %177 = vmatpush1.bf16.msra.mxu0 0
    %178 = vmatprep.subr.bf16.mxu0 0
    %179 = vmatpush1.bf16.msra.mxu0 0
    %180 = vmatprep.subr.bf16.mxu0 0
    %181 = vmatpush1.bf16.msra.mxu0 0
    %182 = vmatprep.mubr.bf16.mxu0 0
    %183 = vmatmul.mubr.bf16.gmra.mrb[0].mxu0 %v141
    %v184 = vpop.f32.mrb[0].mxu0
    %v185 = vadd.f32 0.0, %v184
    %v186 = vpop.f32.mrb[0].mxu0
    %v187 = vpop.f32.mrb[0].mxu0
    %v188 = vadd.f32 0.0, %v187
    %v189 = vpop.f32.mrb[0].mxu0
    %190 = vmatprep.mubr.bf16.mxu0 0
    %191 = vmatmul.mubr.bf16.gmra.mrb[0].mxu0 %v144
    %v192 = vpop.f32.mrb[0].mxu0
    %v193 = vadd.f32 0.0, %v192
    %v194 = vpop.f32.mrb[0].mxu0
    %v195 = vpop.f32.mrb[0].mxu0
    %v196 = vadd.f32 0.0, %v195
    %v197 = vpop.f32.mrb[0].mxu0
    %198 = vdwg.mxu0
    %v203 = vunpack.c.l.b16 %v30
    %v204 = vunpack.c.l.b16 %v31
    %v205 = vunpack.c.l.b16 %v32
    %v206 = vunpack.c.l.b16 %v33
    %v207 = vpack.c.b16 %v204, %v203
    %v208 = vpack.c.b16 %v206, %v205
    %v218 = vunpack.c.l.b16 %v34
    %v219 = vunpack.c.l.b16 %v35
    %v220 = vunpack.c.l.b16 %v36
    %v221 = vunpack.c.l.b16 %v37
    %v222 = vunpack.c.l.b16 %v38
    %v223 = vunpack.c.l.b16 %v39
    %v224 = vunpack.c.l.b16 %v40
    %v225 = vunpack.c.l.b16 %v41
    %v226 = vunpack.c.l.b16 %v42
    %v227 = vpack.c.b16 %v219, %v218
    %v228 = vpack.c.b16 %v221, %v220
    %v229 = vpack.c.b16 %v223, %v222
    %v230 = vpack.c.b16 %v225, %v224
    %v231 = vpack.c.b16 %v226, %v226
    %v237 = vsel %vm139, %v207, 0
    %v240 = vsel %vm139, %v208, 0
    %v243 = vsel %vm146, %v231, 0
    %245 = vmatprep.subr.bf16.mxu0 0
    %246 = vmatpush1.bf16.msra.mxu0 %v227
    %247 = vmatprep.subr.bf16.mxu0 0
    %248 = vmatpush1.bf16.msra.mxu0 %v228
    %249 = vmatprep.subr.bf16.mxu0 0
    %250 = vmatpush1.bf16.msra.mxu0 %v229
    %251 = vmatprep.subr.bf16.mxu0 0
    %252 = vmatpush1.bf16.msra.mxu0 %v230
    %253 = vmatprep.subr.bf16.mxu0 0
    %254 = vmatpush1.bf16.msra.mxu0 %v243
    %255 = vmatprep.subr.bf16.mxu0 0
    %256 = vmatpush1.bf16.msra.mxu0 0
    %257 = vmatprep.subr.bf16.mxu0 0
    %258 = vmatpush1.bf16.msra.mxu0 0
    %259 = vmatprep.subr.bf16.mxu0 0
    %260 = vmatpush1.bf16.msra.mxu0 0
    %261 = vmatprep.subr.bf16.mxu0 0
    %262 = vmatpush1.bf16.msra.mxu0 0
    %263 = vmatprep.subr.bf16.mxu0 0
    %264 = vmatpush1.bf16.msra.mxu0 0
    %265 = vmatprep.subr.bf16.mxu0 0
    %266 = vmatpush1.bf16.msra.mxu0 0
    %267 = vmatprep.subr.bf16.mxu0 0
    %268 = vmatpush1.bf16.msra.mxu0 0
    %269 = vmatprep.subr.bf16.mxu0 0
    %270 = vmatpush1.bf16.msra.mxu0 0
    %271 = vmatprep.subr.bf16.mxu0 0
    %272 = vmatpush1.bf16.msra.mxu0 0
    %273 = vmatprep.subr.bf16.mxu0 0
    %274 = vmatpush1.bf16.msra.mxu0 0
    %275 = vmatprep.subr.bf16.mxu0 0
    %276 = vmatpush1.bf16.msra.mxu0 0
    %277 = vmatprep.mubr.bf16.mxu0 0
    %278 = vmatmul.mubr.bf16.gmra.mrb[0].mxu0 %v237
    %v279 = vpop.f32.mrb[0].mxu0
    %v280 = vadd.f32 %v185, %v279
    %v281 = vpop.f32.mrb[0].mxu0
    %v282 = vpop.f32.mrb[0].mxu0
    %v283 = vadd.f32 %v188, %v282
    %v284 = vpop.f32.mrb[0].mxu0
    %285 = vmatprep.mubr.bf16.mxu0 0
    %286 = vmatmul.mubr.bf16.gmra.mrb[0].mxu0 %v240
    %v287 = vpop.f32.mrb[0].mxu0
    %v288 = vadd.f32 %v193, %v287
    %v289 = vpop.f32.mrb[0].mxu0
    %v290 = vpop.f32.mrb[0].mxu0
    %v291 = vadd.f32 %v196, %v290
    %v292 = vpop.f32.mrb[0].mxu0
    %293 = vdwg.mxu0
    %v294 = vld [vmem:[%s0] sm:$0xe]
    %v295 = vld [vmem:[%s0 + $0xc] sm:$0xe]
    %vm300 = vcmask 1042432
    %vm301 = vcmask 1046532
    %vm302 = vmor %vm300, %vm301
    %v303 = vrot.slane %v294, 5
    %v304 = vrot.slane %v303, 4
    %v305 = vrot.slane %v31, 5
    %v306 = vsel %vm302, %v304, %v305
    %v307 = vrot.slane %v305, 4
    %v308 = vrot.slane %v43, 5
    %v309 = vsel %vm302, %v307, %v308
    %v310 = vrot.slane %v295, 5
    %v311 = vrot.slane %v310, 4
    %v312 = vrot.slane %v33, 5
    %v313 = vsel %vm302, %v311, %v312
    %v314 = vrot.slane %v312, 4
    %v315 = vrot.slane %v44, 5
    %v316 = vsel %vm302, %v314, %v315
    %s317 = scalar_lea.vmem [#allocation2], 72
    %v318 = vld [vmem:[%s317] sm:$0xf]
    %v319 = vld [vmem:[%s317 + $0x4] sm:$0xf]
    %v320 = vld [vmem:[%s317 + $0x8] sm:$0xf]
    %v321 = vld [vmem:[%s317 + $0xc] sm:$0xf]
    %v322 = vld [vmem:[%s317 + $0x10] sm:$0xf]
    %v323 = vld [vmem:[%s317 + $0x14] sm:$0xf]
    %v324 = vld [vmem:[%s317 + $0x18] sm:$0xf]
    %v325 = vld [vmem:[%s317 + $0x1c] sm:$0xf]
    %v326 = vld [vmem:[%s317 + $0x20] sm:$0xf]
    %v327 = vunpack.c.l.b16 %v306
    %v328 = vunpack.c.l.b16 %v309
    %v329 = vunpack.c.l.b16 %v313
    %v330 = vunpack.c.l.b16 %v316
    %v331 = vpack.c.b16 %v328, %v327
    %v332 = vpack.c.b16 %v330, %v329
    %v342 = vunpack.c.l.b16 %v318
    %v343 = vunpack.c.l.b16 %v319
    %v344 = vunpack.c.l.b16 %v320
    %v345 = vunpack.c.l.b16 %v321
    %v346 = vunpack.c.l.b16 %v322
    %v347 = vunpack.c.l.b16 %v323
    %v348 = vunpack.c.l.b16 %v324
    %v349 = vunpack.c.l.b16 %v325
    %v350 = vunpack.c.l.b16 %v326
    %v351 = vpack.c.b16 %v343, %v342
    %v352 = vpack.c.b16 %v345, %v344
    %v353 = vpack.c.b16 %v347, %v346
    %v354 = vpack.c.b16 %v349, %v348
    %v355 = vpack.c.b16 %v350, %v350
    %v361 = vsel %vm139, %v331, 0
    %v364 = vsel %vm139, %v332, 0
    %v367 = vsel %vm146, %v355, 0
    %369 = vmatprep.subr.bf16.mxu0 0
    %370 = vmatpush1.bf16.msra.mxu0 %v351
    %371 = vmatprep.subr.bf16.mxu0 0
    %372 = vmatpush1.bf16.msra.mxu0 %v352
    %373 = vmatprep.subr.bf16.mxu0 0
    %374 = vmatpush1.bf16.msra.mxu0 %v353
    %375 = vmatprep.subr.bf16.mxu0 0
    %376 = vmatpush1.bf16.msra.mxu0 %v354
    %377 = vmatprep.subr.bf16.mxu0 0
    %378 = vmatpush1.bf16.msra.mxu0 %v367
    %379 = vmatprep.subr.bf16.mxu0 0
    %380 = vmatpush1.bf16.msra.mxu0 0
    %381 = vmatprep.subr.bf16.mxu0 0
    %382 = vmatpush1.bf16.msra.mxu0 0
    %383 = vmatprep.subr.bf16.mxu0 0
    %384 = vmatpush1.bf16.msra.mxu0 0
    %385 = vmatprep.subr.bf16.mxu0 0
    %386 = vmatpush1.bf16.msra.mxu0 0
    %387 = vmatprep.subr.bf16.mxu0 0
    %388 = vmatpush1.bf16.msra.mxu0 0
    %389 = vmatprep.subr.bf16.mxu0 0
    %390 = vmatpush1.bf16.msra.mxu0 0
    %391 = vmatprep.subr.bf16.mxu0 0
    %392 = vmatpush1.bf16.msra.mxu0 0
    %393 = vmatprep.subr.bf16.mxu0 0
    %394 = vmatpush1.bf16.msra.mxu0 0
    %395 = vmatprep.subr.bf16.mxu0 0
    %396 = vmatpush1.bf16.msra.mxu0 0
    %397 = vmatprep.subr.bf16.mxu0 0
    %398 = vmatpush1.bf16.msra.mxu0 0
    %399 = vmatprep.subr.bf16.mxu0 0
    %400 = vmatpush1.bf16.msra.mxu0 0
    %401 = vmatprep.mubr.bf16.mxu0 0
    %402 = vmatmul.mubr.bf16.gmra.mrb[0].mxu0 %v361
    %v403 = vpop.f32.mrb[0].mxu0
    %v404 = vadd.f32 0.0, %v403
    %v405 = vpop.f32.mrb[0].mxu0
    %v406 = vpop.f32.mrb[0].mxu0
    %v407 = vadd.f32 0.0, %v406
    %v408 = vpop.f32.mrb[0].mxu0
    %409 = vmatprep.mubr.bf16.mxu0 0
    %410 = vmatmul.mubr.bf16.gmra.mrb[0].mxu0 %v364
    %v411 = vpop.f32.mrb[0].mxu0
    %v412 = vadd.f32 0.0, %v411
    %v413 = vpop.f32.mrb[0].mxu0
    %v414 = vpop.f32.mrb[0].mxu0
    %v415 = vadd.f32 0.0, %v414
    %v416 = vpop.f32.mrb[0].mxu0
    %417 = vdwg.mxu0
    %v418 = vadd.f32 %v280, %v404
    %v419 = vadd.f32 %v283, %v407
    %v420 = vadd.f32 %v288, %v412
    %v421 = vadd.f32 %v291, %v415
    %v422 = vadd.f32 %v418, %v419
    %v423 = vadd.f32 %v422, %v420
    %v424 = vadd.f32 %v423, %v421
    %v425 = vrot.slane %v424, 4
    %v426 = vadd.f32 %v424, %v425
    %v427 = vrot.slane %v426, 2
    %v428 = vadd.f32 %v426, %v427
    %v429 = vrot.slane %v428, 1
    %v430 = vadd.f32 %v428, %v429
    %v431 = vrcp.pop 32.0
    %v432 = vmul.f32 %v430, %v431
    %v433 = vsub.f32 %v418, %v432
    %v434 = vsub.f32 %v419, %v432
    %v435 = vsub.f32 %v420, %v432
    %v436 = vsub.f32 %v421, %v432
    %437 = vst [vmem:[#allocation6] sm:$0x1] %v432
    %v438 = vmul.f32 %v433, %v433
    %v439 = vmul.f32 %v434, %v434
    %v440 = vmul.f32 %v435, %v435
    %v441 = vmul.f32 %v436, %v436
    %v442 = vadd.f32 %v438, %v439
    %v443 = vadd.f32 %v442, %v440
    %v444 = vadd.f32 %v443, %v441
    %v445 = vrot.slane %v444, 4
    %v446 = vadd.f32 %v444, %v445
    %v447 = vrot.slane %v446, 2
    %v448 = vadd.f32 %v446, %v447
    %v449 = vrot.slane %v448, 1
    %v450 = vadd.f32 %v448, %v449
    %451 = vst [vmem:[#allocation6 + $0x1] sm:$0x1] %v450
    %v452 = vpack.c.bf16 %v419, %v418
    %v453 = vpack.c.bf16 %v421, %v420
    %v456 = vunpack.c.l.b16 %v452
    %v457 = vunpack.c.h.b16 %v452
    %v458 = vunpack.c.l.b16 %v453
    %v459 = vunpack.c.h.b16 %v453
    %v460 = vpack.c.b16 %v456, %v456
    %v461 = vpack.c.b16 %v457, %v457
    %v462 = vpack.c.b16 %v458, %v458
    %v463 = vpack.c.b16 %v459, %v459
    %468 = vst [vmem:[#allocation5] sm:$0xf] %v460
    %469 = vst [vmem:[#allocation5 + $0x4] sm:$0xf] %v461
    %470 = vst [vmem:[#allocation5 + $0x8] sm:$0xf] %v462
    %471 = vst [vmem:[#allocation5 + $0xc] sm:$0xf] %v463
    // Predicated region
    $region14: #{tpu_custom_call.1} parent=1 // pred_check
      _
    $region15: #{tpu_custom_call.1} parent=1 // pred_check_branch
      %473 = sbr.rel (0) target = $region17
    $region16: #{tpu_custom_call.1} parent=1 // pred_region
      %s475 = ssub.s32 256, 256
      %476 = vsyncadd [#allocation4], %s475
      %s477 = sshll.u32 [#allocation5], 4
      %s478 = int_to_ptr.vmem [resolvable:$true] %s477
      %483 = dma.vmem_to_hbm [thread:$0]  %s478, 256, %s2, [#allocation4], 64, 64, 4
    $region17: #{tpu_custom_call.1} parent=1 // pred_fallthru
      _
    // Predicated region
    $region18: #{tpu_custom_call.1} parent=1 // pred_check
      _
    $region19: #{tpu_custom_call.1} parent=1 // pred_check_branch
      %485 = sbr.rel (0) target = $region21
    $region20: #{tpu_custom_call.1} parent=1 // pred_region
      %s487 = ssub.s32 32, 32
      %488 = vsyncadd [#allocation7], %s487
      %s490 = sshll.u32 [#allocation6], 4
      %s491 = int_to_ptr.vmem [resolvable:$true] %s490
      %493 = dma.vmem_to_hbm [thread:$0]  %s491, 32, %s3, [#allocation7]
    $region21: #{tpu_custom_call.1} parent=1 // pred_fallthru
      _
    // Predicated region
    $region22: #{tpu_custom_call.1} parent=1 // pred_check
      _
    $region23: #{tpu_custom_call.1} parent=1 // pred_check_branch
      %495 = sbr.rel (0) target = $region25
    $region24: #{tpu_custom_call.1} parent=1 // pred_region
      %496 = dma.done [#allocation4], 256
    $region25: #{tpu_custom_call.1} parent=1 // pred_fallthru
      _
    // Predicated region
    $region26: #{tpu_custom_call.1} parent=1 // pred_check
      _
    $region27: #{tpu_custom_call.1} parent=1 // pred_check_branch
      %498 = sbr.rel (0) target = $region29
    $region28: #{tpu_custom_call.1} parent=1 // pred_region
      %499 = dma.done [#allocation7], 32
    $region29: #{tpu_custom_call.1} parent=1 // pred_fallthru
      _
    %500 = vsyncpa [#allocation3], 1
    %501 = vsyncpa [#allocation4], 1
    %502 = vsyncpa [#allocation7], 1

</llo_original>
